<compile_context>
chip_gen: v5e
topology: v5e:2x2
jax: 0.10.0
libtpu: 0.0.40
codegen_flags: <defaults>
</compile_context>

<pallas_src>
import jax
import jax.numpy as jnp
from jax.experimental import pallas as pl
from jax.experimental.pallas import tpu as pltpu


def _local_conv_kernel(x_ref, w_ref, o_ref):
    # x_ref: (1, Cb, H,  W)      full-height input block (resident across the h-tile axis)
    # w_ref: (1, Cb, 9, Th, W)   per-pixel 3x3 taps for this (n, c-block, h-tile)
    # o_ref: (1, Cb, Th, W)
    _, cb, H, W = x_ref.shape
    th = o_ref.shape[2]
    f32 = jnp.float32

    hi = pl.program_id(2)
    h0 = hi * th
    start_mid = pl.multiple_of(h0, 8) if th % 8 == 0 else h0

    # Rows of x needed by this tile: [h0-1, h0+th], with zero rows outside [0, H).
    mid = x_ref[0, :, pl.ds(start_mid, th), :].astype(f32)                  # (Cb, Th, W)
    top = x_ref[0, :, pl.ds(jnp.maximum(h0 - 1, 0), 1), :].astype(f32)      # (Cb, 1, W)
    bot = x_ref[0, :, pl.ds(jnp.minimum(h0 + th, H - 1), 1), :].astype(f32) # (Cb, 1, W)
    top = jnp.where(h0 > 0, top, 0.0)          # zero halo above the first tile
    bot = jnp.where(h0 + th < H, bot, 0.0)     # zero halo below the last tile

    # Build the padded tile in VMEM: (Cb, Th+2, W+2).
    xt = jnp.concatenate([top, mid, bot], axis=1)                           # (Cb, Th+2, W)
    zcol = jnp.zeros((cb, th + 2, 1), f32)
    xp = jnp.concatenate([zcol, xt, zcol], axis=2)                          # (Cb, Th+2, W+2)

    # Hoist the 3 column (lane) shifts once; only row (sublane) slices in the tap loop.
    cols = [xp[:, :, dw:dw + W] for dw in range(3)]                         # 3 x (Cb, Th+2, W)

    acc = jnp.zeros((cb, th, W), f32)
    for dh in range(3):
        for dw in range(3):
            tap = cols[dw][:, dh:dh + th, :]                  # x_pad[.., h+dh, w+dw]
            w_tap = w_ref[0, :, dh * 3 + dw, :, :].astype(f32)
            acc = acc + tap * w_tap
    o_ref[0] = acc.astype(o_ref.dtype)


def _largest_divisor(n, ok):
    for d in range(n, 0, -1):
        if n % d == 0 and ok(d):
            return d
    return None


def _pick_tiles(N, C, H, W, x_itemsize, w_itemsize, budget_bytes=24 * 1024 * 1024):
    """(channel block, H tile) whose per-step VMEM working set fits the budget."""

    def cost(cb, th):
        x_bytes = 2 * cb * H * W * x_itemsize            # double-buffered input block (full H)
        w_bytes = 2 * cb * 9 * th * W * w_itemsize       # double-buffered weight block
        o_bytes = 2 * cb * th * W * x_itemsize           # double-buffered output block
        tmp = 9 * cb * (th + 2) * (W + 2) * 4            # in-kernel f32 temporaries
        return x_bytes + w_bytes + o_bytes + tmp

    # 1) Prefer full-height tiles with the widest channel block that fits.
    cb = _largest_divisor(C, lambda d: cost(d, H) <= budget_bytes)
    if cb is not None:
        th = H
    else:
        # 2) Even one channel at full height is too big: tile H (zero halo built in-kernel).
        cb = 1
        cands = [d for d in range(H, 0, -1) if H % d == 0 and (d % 8 == 0 or d == H)]
        th = next((d for d in cands if cost(1, d) <= budget_bytes), min(cands))

    # Keep >= 2 grid steps so both v7x TensorCores get work.
    if N * (C // cb) * (H // th) < 2 and cb > 1:
        smaller = _largest_divisor(C, lambda d: d < cb)
        if smaller is not None:
            cb = smaller
    return cb, th


def conv2d_local(x, weight):
    """x: (N, C, H, W); weight: (N, C*9, H, W) -> (N, C, H, W)."""
    N, C, H, W = x.shape
    assert weight.shape == (N, C * 9, H, W), weight.shape

    # Metadata-only reshape: expose the 9 taps as their own axis.
    w = weight.reshape(N, C, 9, H, W)

    x_isz = jnp.dtype(x.dtype).itemsize
    w_isz = jnp.dtype(weight.dtype).itemsize
    cb, th = _pick_tiles(N, C, H, W, x_isz, w_isz)
    grid = (N, C // cb, H // th)

    flops = 17 * N * C * H * W                            # 9 mul + 8 add per output
    bytes_accessed = int(
        N * C * H * W * x_isz                             # x: read once per (n, c-block)
        + N * C * 9 * H * W * w_isz                       # weight: dominant stream
        + N * C * H * W * x_isz)                          # out

    out = pl.pallas_call(
        _local_conv_kernel,
        out_shape=jax.ShapeDtypeStruct((N, C, H, W), x.dtype),
        grid_spec=pltpu.PrefetchScalarGridSpec(
            num_scalar_prefetch=0,
            grid=grid,
            in_specs=[
                # x: full height, index map ignores h -> stays resident across the h axis.
                pl.BlockSpec((1, cb, H, W), lambda n, c, h: (n, c, 0, 0)),
                pl.BlockSpec((1, cb, 9, th, W), lambda n, c, h: (n, c, 0, h, 0)),
            ],
            out_specs=pl.BlockSpec((1, cb, th, W), lambda n, c, h: (n, c, h, 0)),
        ),
        compiler_params=pltpu.CompilerParams(
            dimension_semantics=("parallel", "parallel", "arbitrary"),
            vmem_limit_bytes=48 * 1024 * 1024),
        cost_estimate=pl.CostEstimate(
            flops=flops, transcendentals=0, bytes_accessed=bytes_accessed),
    )(x, w)
    return out


def conv2d_local_ref(x, weight):
    """Pure-JAX reference for validation."""
    N, C, H, W = x.shape
    x_pad = jnp.pad(x, ((0, 0), (0, 0), (1, 1), (1, 1)))
    w = weight.reshape(N, C, 9, H, W)
    out = jnp.zeros((N, C, H, W), jnp.float32)
    for k in range(9):
        dh, dw = divmod(k, 3)
        out = out + (x_pad[:, :, dh:dh + H, dw:dw + W].astype(jnp.float32)
                     * w[:, :, k].astype(jnp.float32))
    return out.astype(x.dtype)


if __name__ == "__main__":
    # Small deterministic example (Conv2dLocal has no parameters of its own; the "weight"
    # is the per-pixel kernel tensor produced upstream in GuideNet).
    N, C, H, W = 2, 4, 16, 16
    key = jax.random.PRNGKey(0)
    k1, k2 = jax.random.split(key)
    x = jax.random.normal(k1, (N, C, H, W), dtype=jnp.float32)
    weight = jax.random.normal(k2, (N, C * 9, H, W), dtype=jnp.float32)

    out = conv2d_local(x, weight)
    out = jax.block_until_ready(out)

    ref = conv2d_local_ref(x, weight)
    assert out.shape == (N, C, H, W)
    assert jnp.allclose(out, ref, atol=1e-5, rtol=1e-5), "mismatch vs reference"

    print("KERNEL_OK")
</pallas_src>

<mosaic_0001>
module attributes {stable_mosaic.version = 11 : i64} {
  func.func @_local_conv_kernel(%arg0: i32, %arg1: i32, %arg2: i32, %arg3: memref<1x4x16x16xf32, #tpu.memory_space<vmem>>, %arg4: memref<1x4x9x16x16xf32, #tpu.memory_space<vmem>>, %arg5: memref<1x4x16x16xf32, #tpu.memory_space<vmem>>) attributes {dimension_semantics = [#tpu.dimension_semantics<parallel>, #tpu.dimension_semantics<parallel>, #tpu.dimension_semantics<arbitrary>], iteration_bounds = array<i64: 2, 1, 1>, scalar_prefetch = 0 : i64, scratch_operands = 0 : i64, tpu.core_type = #tpu.core_type<tc>, window_params = [{transform_indices = @transform_0, window_bounds = array<i64: 1, 4, 16, 16>}, {transform_indices = @transform_1, window_bounds = array<i64: 1, 4, 9, 16, 16>}, {transform_indices = @transform_2, window_bounds = array<i64: 1, 4, 16, 16>}]} {
    %c16_i32 = arith.constant 16 : i32
    %0 = arith.muli %arg2, %c16_i32 : i32
    %1 = tpu.assume_multiple %0, 8 : i32
    %c0 = arith.constant 0 : index
    %c0_0 = arith.constant 0 : index
    %2 = arith.index_cast %1 : i32 to index
    %c0_1 = arith.constant 0 : index
    %3 = vector.load %arg3[%c0, %c0_0, %2, %c0_1] : memref<1x4x16x16xf32, #tpu.memory_space<vmem>>, vector<1x4x16x16xf32>
    %4 = vector.shape_cast %3 : vector<1x4x16x16xf32> to vector<4x16x16xf32>
    %c1_i32 = arith.constant 1 : i32
    %5 = arith.subi %0, %c1_i32 : i32
    %c0_i32 = arith.constant 0 : i32
    %6 = arith.maxsi %5, %c0_i32 : i32
    %c0_2 = arith.constant 0 : index
    %c0_3 = arith.constant 0 : index
    %7 = arith.index_cast %6 : i32 to index
    %c0_4 = arith.constant 0 : index
    %8 = vector.load %arg3[%c0_2, %c0_3, %7, %c0_4] : memref<1x4x16x16xf32, #tpu.memory_space<vmem>>, vector<1x4x1x16xf32>
    %9 = vector.shape_cast %8 : vector<1x4x1x16xf32> to vector<4x1x16xf32>
    %c16_i32_5 = arith.constant 16 : i32
    %10 = arith.addi %0, %c16_i32_5 : i32
    %c15_i32 = arith.constant 15 : i32
    %11 = arith.minsi %10, %c15_i32 : i32
    %c0_6 = arith.constant 0 : index
    %c0_7 = arith.constant 0 : index
    %12 = arith.index_cast %11 : i32 to index
    %c0_8 = arith.constant 0 : index
    %13 = vector.load %arg3[%c0_6, %c0_7, %12, %c0_8] : memref<1x4x16x16xf32, #tpu.memory_space<vmem>>, vector<1x4x1x16xf32>
    %14 = vector.shape_cast %13 : vector<1x4x1x16xf32> to vector<4x1x16xf32>
    %c0_i32_9 = arith.constant 0 : i32
    %15 = arith.cmpi sgt, %0, %c0_i32_9 : i32
    %cst = arith.constant 0.000000e+00 : f32
    %16 = vector.broadcast %cst : f32 to vector<4x1x16xf32>
    %17 = arith.select %15, %9, %16 : vector<4x1x16xf32>
    %c16_i32_10 = arith.constant 16 : i32
    %18 = arith.addi %0, %c16_i32_10 : i32
    %c16_i32_11 = arith.constant 16 : i32
    %19 = arith.cmpi slt, %18, %c16_i32_11 : i32
    %cst_12 = arith.constant 0.000000e+00 : f32
    %20 = vector.broadcast %cst_12 : f32 to vector<4x1x16xf32>
    %21 = arith.select %19, %14, %20 : vector<4x1x16xf32>
    %22 = tpu.concatenate %17, %4, %21 in 1 : vector<4x1x16xf32>, vector<4x16x16xf32>, vector<4x1x16xf32> -> vector<4x18x16xf32>
    %cst_13 = arith.constant 0.000000e+00 : f32
    %23 = vector.broadcast %cst_13 : f32 to vector<4x18x1xf32>
    %24 = tpu.concatenate %23, %22, %23 in 2 : vector<4x18x1xf32>, vector<4x18x16xf32>, vector<4x18x1xf32> -> vector<4x18x18xf32>
    %25 = vector.extract_strided_slice %24 {offsets = [0, 0, 0], sizes = [4, 18, 16], strides = [1, 1, 1]} : vector<4x18x18xf32> to vector<4x18x16xf32>
    %26 = vector.extract_strided_slice %24 {offsets = [0, 0, 1], sizes = [4, 18, 16], strides = [1, 1, 1]} : vector<4x18x18xf32> to vector<4x18x16xf32>
    %27 = vector.extract_strided_slice %24 {offsets = [0, 0, 2], sizes = [4, 18, 16], strides = [1, 1, 1]} : vector<4x18x18xf32> to vector<4x18x16xf32>
    %cst_14 = arith.constant 0.000000e+00 : f32
    %28 = vector.broadcast %cst_14 : f32 to vector<4x16x16xf32>
    %29 = vector.extract_strided_slice %25 {offsets = [0, 0, 0], sizes = [4, 16, 16], strides = [1, 1, 1]} : vector<4x18x16xf32> to vector<4x16x16xf32>
    %c0_15 = arith.constant 0 : index
    %c0_16 = arith.constant 0 : index
    %c0_17 = arith.constant 0 : index
    %c0_18 = arith.constant 0 : index
    %c0_19 = arith.constant 0 : index
    %30 = vector.load %arg4[%c0_15, %c0_16, %c0_17, %c0_18, %c0_19] : memref<1x4x9x16x16xf32, #tpu.memory_space<vmem>>, vector<1x4x1x16x16xf32>
    %31 = vector.shape_cast %30 : vector<1x4x1x16x16xf32> to vector<4x16x16xf32>
    %32 = arith.mulf %29, %31 : vector<4x16x16xf32>
    %33 = arith.addf %28, %32 : vector<4x16x16xf32>
    %34 = vector.extract_strided_slice %26 {offsets = [0, 0, 0], sizes = [4, 16, 16], strides = [1, 1, 1]} : vector<4x18x16xf32> to vector<4x16x16xf32>
    %c0_20 = arith.constant 0 : index
    %c0_21 = arith.constant 0 : index
    %c1 = arith.constant 1 : index
    %c0_22 = arith.constant 0 : index
    %c0_23 = arith.constant 0 : index
    %35 = vector.load %arg4[%c0_20, %c0_21, %c1, %c0_22, %c0_23] : memref<1x4x9x16x16xf32, #tpu.memory_space<vmem>>, vector<1x4x1x16x16xf32>
    %36 = vector.shape_cast %35 : vector<1x4x1x16x16xf32> to vector<4x16x16xf32>
    %37 = arith.mulf %34, %36 : vector<4x16x16xf32>
    %38 = arith.addf %33, %37 : vector<4x16x16xf32>
    %39 = vector.extract_strided_slice %27 {offsets = [0, 0, 0], sizes = [4, 16, 16], strides = [1, 1, 1]} : vector<4x18x16xf32> to vector<4x16x16xf32>
    %c0_24 = arith.constant 0 : index
    %c0_25 = arith.constant 0 : index
    %c2 = arith.constant 2 : index
    %c0_26 = arith.constant 0 : index
    %c0_27 = arith.constant 0 : index
    %40 = vector.load %arg4[%c0_24, %c0_25, %c2, %c0_26, %c0_27] : memref<1x4x9x16x16xf32, #tpu.memory_space<vmem>>, vector<1x4x1x16x16xf32>
    %41 = vector.shape_cast %40 : vector<1x4x1x16x16xf32> to vector<4x16x16xf32>
    %42 = arith.mulf %39, %41 : vector<4x16x16xf32>
    %43 = arith.addf %38, %42 : vector<4x16x16xf32>
    %44 = vector.extract_strided_slice %25 {offsets = [0, 1, 0], sizes = [4, 16, 16], strides = [1, 1, 1]} : vector<4x18x16xf32> to vector<4x16x16xf32>
    %c0_28 = arith.constant 0 : index
    %c0_29 = arith.constant 0 : index
    %c3 = arith.constant 3 : index
    %c0_30 = arith.constant 0 : index
    %c0_31 = arith.constant 0 : index
    %45 = vector.load %arg4[%c0_28, %c0_29, %c3, %c0_30, %c0_31] : memref<1x4x9x16x16xf32, #tpu.memory_space<vmem>>, vector<1x4x1x16x16xf32>
    %46 = vector.shape_cast %45 : vector<1x4x1x16x16xf32> to vector<4x16x16xf32>
    %47 = arith.mulf %44, %46 : vector<4x16x16xf32>
    %48 = arith.addf %43, %47 : vector<4x16x16xf32>
    %49 = vector.extract_strided_slice %26 {offsets = [0, 1, 0], sizes = [4, 16, 16], strides = [1, 1, 1]} : vector<4x18x16xf32> to vector<4x16x16xf32>
    %c0_32 = arith.constant 0 : index
    %c0_33 = arith.constant 0 : index
    %c4 = arith.constant 4 : index
    %c0_34 = arith.constant 0 : index
    %c0_35 = arith.constant 0 : index
    %50 = vector.load %arg4[%c0_32, %c0_33, %c4, %c0_34, %c0_35] : memref<1x4x9x16x16xf32, #tpu.memory_space<vmem>>, vector<1x4x1x16x16xf32>
    %51 = vector.shape_cast %50 : vector<1x4x1x16x16xf32> to vector<4x16x16xf32>
    %52 = arith.mulf %49, %51 : vector<4x16x16xf32>
    %53 = arith.addf %48, %52 : vector<4x16x16xf32>
    %54 = vector.extract_strided_slice %27 {offsets = [0, 1, 0], sizes = [4, 16, 16], strides = [1, 1, 1]} : vector<4x18x16xf32> to vector<4x16x16xf32>
    %c0_36 = arith.constant 0 : index
    %c0_37 = arith.constant 0 : index
    %c5 = arith.constant 5 : index
    %c0_38 = arith.constant 0 : index
    %c0_39 = arith.constant 0 : index
    %55 = vector.load %arg4[%c0_36, %c0_37, %c5, %c0_38, %c0_39] : memref<1x4x9x16x16xf32, #tpu.memory_space<vmem>>, vector<1x4x1x16x16xf32>
    %56 = vector.shape_cast %55 : vector<1x4x1x16x16xf32> to vector<4x16x16xf32>
    %57 = arith.mulf %54, %56 : vector<4x16x16xf32>
    %58 = arith.addf %53, %57 : vector<4x16x16xf32>
    %59 = vector.extract_strided_slice %25 {offsets = [0, 2, 0], sizes = [4, 16, 16], strides = [1, 1, 1]} : vector<4x18x16xf32> to vector<4x16x16xf32>
    %c0_40 = arith.constant 0 : index
    %c0_41 = arith.constant 0 : index
    %c6 = arith.constant 6 : index
    %c0_42 = arith.constant 0 : index
    %c0_43 = arith.constant 0 : index
    %60 = vector.load %arg4[%c0_40, %c0_41, %c6, %c0_42, %c0_43] : memref<1x4x9x16x16xf32, #tpu.memory_space<vmem>>, vector<1x4x1x16x16xf32>
    %61 = vector.shape_cast %60 : vector<1x4x1x16x16xf32> to vector<4x16x16xf32>
    %62 = arith.mulf %59, %61 : vector<4x16x16xf32>
    %63 = arith.addf %58, %62 : vector<4x16x16xf32>
    %64 = vector.extract_strided_slice %26 {offsets = [0, 2, 0], sizes = [4, 16, 16], strides = [1, 1, 1]} : vector<4x18x16xf32> to vector<4x16x16xf32>
    %c0_44 = arith.constant 0 : index
    %c0_45 = arith.constant 0 : index
    %c7 = arith.constant 7 : index
    %c0_46 = arith.constant 0 : index
    %c0_47 = arith.constant 0 : index
    %65 = vector.load %arg4[%c0_44, %c0_45, %c7, %c0_46, %c0_47] : memref<1x4x9x16x16xf32, #tpu.memory_space<vmem>>, vector<1x4x1x16x16xf32>
    %66 = vector.shape_cast %65 : vector<1x4x1x16x16xf32> to vector<4x16x16xf32>
    %67 = arith.mulf %64, %66 : vector<4x16x16xf32>
    %68 = arith.addf %63, %67 : vector<4x16x16xf32>
    %69 = vector.extract_strided_slice %27 {offsets = [0, 2, 0], sizes = [4, 16, 16], strides = [1, 1, 1]} : vector<4x18x16xf32> to vector<4x16x16xf32>
    %c0_48 = arith.constant 0 : index
    %c0_49 = arith.constant 0 : index
    %c8 = arith.constant 8 : index
    %c0_50 = arith.constant 0 : index
    %c0_51 = arith.constant 0 : index
    %70 = vector.load %arg4[%c0_48, %c0_49, %c8, %c0_50, %c0_51] : memref<1x4x9x16x16xf32, #tpu.memory_space<vmem>>, vector<1x4x1x16x16xf32>
    %71 = vector.shape_cast %70 : vector<1x4x1x16x16xf32> to vector<4x16x16xf32>
    %72 = arith.mulf %69, %71 : vector<4x16x16xf32>
    %73 = arith.addf %68, %72 : vector<4x16x16xf32>
    %c0_52 = arith.constant 0 : index
    %c0_53 = arith.constant 0 : index
    %c0_54 = arith.constant 0 : index
    %c0_55 = arith.constant 0 : index
    %74 = vector.load %arg5[%c0_52, %c0_53, %c0_54, %c0_55] : memref<1x4x16x16xf32, #tpu.memory_space<vmem>>, vector<1x4x16x16xf32>
    %75 = vector.shape_cast %74 : vector<1x4x16x16xf32> to vector<4x16x16xf32>
    %76 = vector.shape_cast %73 : vector<4x16x16xf32> to vector<1x4x16x16xf32>
    tpu.vector_store %arg5[%c0_52, %c0_53, %c0_54, %c0_55], %76 {strides = array<i32>} : memref<1x4x16x16xf32, #tpu.memory_space<vmem>>, vector<1x4x16x16xf32>,
    return
  }
  func.func @transform_0(%arg0: i32, %arg1: i32, %arg2: i32) -> (i32, i32, i32, i32) {
    %c0_i32 = arith.constant 0 : i32
    %c0_i32_0 = arith.constant 0 : i32
    %c0_i32_1 = arith.constant 0 : i32
    return %arg0, %arg1, %c0_i32, %c0_i32_0 : i32, i32, i32, i32
  }
  func.func @transform_1(%arg0: i32, %arg1: i32, %arg2: i32) -> (i32, i32, i32, i32, i32) {
    %c0_i32 = arith.constant 0 : i32
    %c0_i32_0 = arith.constant 0 : i32
    %c0_i32_1 = arith.constant 0 : i32
    return %arg0, %arg1, %c0_i32, %arg2, %c0_i32_0 : i32, i32, i32, i32, i32
  }
  func.func @transform_2(%arg0: i32, %arg1: i32, %arg2: i32) -> (i32, i32, i32, i32) {
    %c0_i32 = arith.constant 0 : i32
    %c0_i32_0 = arith.constant 0 : i32
    return %arg0, %arg1, %arg2, %c0_i32 : i32, i32, i32, i32
  }
}

</mosaic_0001>

<llo_original>
// kernel: tpu_custom_call.1
$region0: #{tpu_custom_call.1}
  #allocation0 [shape = 'u32[]', space=smem, size = 0x4, offset = 0x4, fixed_abs, tag = 'smem constant byte address 0x4 - core index']
  #allocation1 [shape = 'u32[72,128]{1,0:T(1,128)}', space=vmem, size = 0x9000, scoped, tag = 'internal scratch']
  %s0 = inlined_call_operand.hbm [shape: f32[2,4,16,16], index: 0, kind: input, shape index: {}]
  %s1 = inlined_call_operand.hbm [shape: f32[2,4,9,16,16], index: 1, kind: input, shape index: {}]
  %s2 = inlined_call_operand.hbm [shape: f32[2,4,16,16], index: 2, kind: output, shape index: {}]
  %s3 = sld [smem:[#allocation0]]
  $region49: #{tpu_custom_call.1} parent=0
    _
  %s5 = ssub.s32 1, %s3
  %s6 = scalar_select 0, %s5, %s3
  $region1: #{tpu_custom_call.1} parent=0
    #allocation2 [shape = 'u8[65536]{0}', space=vmem, size = 0x10000, scoped, tag = 'input window, operand 0']
    #allocation3 [shape = 's32[2]{0}', space=sflag, size = 0x8, scoped, tag = 'scoped memory for tpu_custom_call.1']
    #allocation4 [shape = 's32[2]{0}', space=sflag, size = 0x8, scoped, tag = 'scoped memory for tpu_custom_call.1']
    #allocation5 [shape = 'u8[589824]{0}', space=vmem, size = 0x90000, scoped, tag = 'input window, operand 1']
    #allocation6 [shape = 's32[2]{0}', space=sflag, size = 0x8, scoped, tag = 'scoped memory for tpu_custom_call.1']
    #allocation7 [shape = 'u8[65536]{0}', space=vmem, size = 0x10000, scoped, tag = 'output window, operand 0']
    %7 = vsyncpa [#allocation3], 0
    %s8 = scalar_lea.sflag [#allocation3], 1
    %9 = vsyncpa %s8, 0
    %10 = vsyncpa [#allocation6], 0
    %s11 = scalar_lea.sflag [#allocation6], 1
    %12 = vsyncpa %s11, 0
    %13 = vsyncpa [#allocation4], 0
    %s14 = scalar_lea.sflag [#allocation4], 1
    %15 = vsyncpa %s14, 0
    loop: start=0, step=1, limit=4
    $region2: #{tpu_custom_call.1} parent=1 // loop_pre_header
      _
    $region3: #{tpu_custom_call.1} parent=1 // loop_header
      %s17 = sphi 0, %s21
      %p18 = scmp.ge.s32.totalorder %s17, 4
      %s24 = sphi 0, %s43
      %s25 = sphi 0, %s39
      %s26 = sphi 0, %s35
      %s27 = sphi 0, %s24
      %s28 = sphi 0, %s25
      %s29 = sphi 0, %s26
      %s30 = sphi 0, %s27
      %s31 = sphi 0, %s28
      %s32 = sphi 0, %s29
      %s48 = sphi 0, %s50
      %s51 = sphi 0, %s48
      %s52 = sphi 0, %s51
      %s68 = sphi 0, %s52
      %s78 = sphi 0, %s80
      %s81 = sphi 0, %s78
      %s82 = sphi 0, %s81
      %s98 = sphi 0, %s82
      %s108 = sphi 0, %s110
      %s111 = sphi 0, %s108
      %s112 = sphi 0, %s111
      %s128 = sphi 0, %s112
    $region4: #{tpu_custom_call.1} parent=1 // loop_header_branch
      %20 = sbr.rel (%p18) target = $region8
    $region5: #{tpu_custom_call.1} parent=1 // loop_body
      %s22 = ssub.s32 %s17, 1
      %s23 = ssub.s32 %s17, 2
      %s33 = sadd.s32 1, %s26
      %p34 = scmp.ge.s32.totalorder %s33, 1
      %s35 = scalar_select %p34, 0, %s33
      %s36 = sadd.s32 1, %s25
      %s37 = scalar_select %p34, %s36, %s25
      %p38 = scmp.ge.s32.totalorder %s37, 1
      %s39 = scalar_select %p38, 0, %s37
      %s40 = sadd.s32 1, %s24
      %s41 = scalar_select %p38, %s40, %s24
      %p42 = scmp.ge.s32.totalorder %s41, 2
      %s43 = scalar_select %p42, 0, %s41
      %s44 = ssub.s32 %s24, %s43
      %s45 = ssub.s32 %s25, %s39
      %s46 = sor.u32 %s44, %s45
      %p47 = scmp.eq.s32.totalorder %s46, 0
      %s49 = sadd.s32 %s48, 1
      %s50 = scalar_select %p47, %s48, %s49
      %p53 = pneg %p47
      %p54 = scmp.eq.s32.totalorder %s17, 1
      %p55 = por %p53, %p54
      %p56 = scmp.ne.s32.totalorder %s48, %s51
      %p57 = scmp.eq.s32.totalorder %s17, 0
      %p58 = por %p56, %p57
      %p59 = scmp.ne.s32.totalorder %s48, %s51
      %p60 = scmp.eq.s32.totalorder %s22, 1
      %p61 = por %p59, %p60
      %p62 = scmp.ne.s32.totalorder %s51, %s52
      %p63 = scmp.eq.s32.totalorder %s22, 0
      %p64 = por %p62, %p63
      %p65 = scmp.ne.s32.totalorder %s51, %s52
      %p66 = scmp.eq.s32.totalorder %s23, 1
      %p67 = por %p65, %p66
      %p69 = scmp.ne.s32.totalorder %s52, %s68
      %p70 = scmp.eq.s32.totalorder %s23, 0
      %p71 = por %p69, %p70
      %s72 = ssub.s32 %s24, %s43
      %s73 = ssub.s32 %s25, %s39
      %s74 = sor.u32 %s72, %s73
      %s75 = ssub.s32 %s26, %s35
      %s76 = sor.u32 %s74, %s75
      %p77 = scmp.eq.s32.totalorder %s76, 0
      %s79 = sadd.s32 %s78, 1
      %s80 = scalar_select %p77, %s78, %s79
      %p83 = pneg %p77
      %p84 = scmp.eq.s32.totalorder %s17, 1
      %p85 = por %p83, %p84
      %p86 = scmp.ne.s32.totalorder %s78, %s81
      %p87 = scmp.eq.s32.totalorder %s17, 0
      %p88 = por %p86, %p87
      %p89 = scmp.ne.s32.totalorder %s78, %s81
      %p90 = scmp.eq.s32.totalorder %s22, 1
      %p91 = por %p89, %p90
      %p92 = scmp.ne.s32.totalorder %s81, %s82
      %p93 = scmp.eq.s32.totalorder %s22, 0
      %p94 = por %p92, %p93
      %p95 = scmp.ne.s32.totalorder %s81, %s82
      %p96 = scmp.eq.s32.totalorder %s23, 1
      %p97 = por %p95, %p96
      %p99 = scmp.ne.s32.totalorder %s82, %s98
      %p100 = scmp.eq.s32.totalorder %s23, 0
      %p101 = por %p99, %p100
      %s102 = ssub.s32 %s24, %s43
      %s103 = ssub.s32 %s25, %s39
      %s104 = sor.u32 %s102, %s103
      %s105 = ssub.s32 %s26, %s35
      %s106 = sor.u32 %s104, %s105
      %p107 = scmp.eq.s32.totalorder %s106, 0
      %s109 = sadd.s32 %s108, 1
      %s110 = scalar_select %p107, %s108, %s109
      %p113 = pneg %p107
      %p114 = scmp.eq.s32.totalorder %s17, 1
      %p115 = por %p113, %p114
      %p116 = scmp.ne.s32.totalorder %s108, %s111
      %p117 = scmp.eq.s32.totalorder %s17, 0
      %p118 = por %p116, %p117
      %p119 = scmp.ne.s32.totalorder %s108, %s111
      %p120 = scmp.eq.s32.totalorder %s22, 1
      %p121 = por %p119, %p120
      %p122 = scmp.ne.s32.totalorder %s111, %s112
      %p123 = scmp.eq.s32.totalorder %s22, 0
      %p124 = por %p122, %p123
      %p125 = scmp.ne.s32.totalorder %s111, %s112
      %p126 = scmp.eq.s32.totalorder %s23, 1
      %p127 = por %p125, %p126
      %p129 = scmp.ne.s32.totalorder %s112, %s128
      %p130 = scmp.eq.s32.totalorder %s23, 0
      %p131 = por %p129, %p130
      %p132 = scmp.le.s32.totalorder 1, %s17
      %p133 = scmp.lt.s32.totalorder %s17, 3
      %p134 = pnand %p132, %p133
      %p135 = pneg %p134
      // Predicated region
      $region9: #{tpu_custom_call.1} parent=5 // pred_check
        _
      $region10: #{tpu_custom_call.1} parent=5 // pred_check_branch
        %137 = sbr.rel (%p134) target = $region12
      $region11: #{tpu_custom_call.1} parent=5 // pred_region
        %s138 = ssub.s32 %s17, 1
      $region12: #{tpu_custom_call.1} parent=5 // pred_fallthru
        _
      %p139 = scmp.lt.s32.totalorder %s17, 2
      // Predicated region
      $region13: #{tpu_custom_call.1} parent=5 // pred_check
        %p140 = pneg %p139
      $region14: #{tpu_custom_call.1} parent=5 // pred_check_branch
        %142 = sbr.rel (%p140) target = $region16
      $region15: #{tpu_custom_call.1} parent=5 // pred_region
        // Predicated region
        $region17: #{tpu_custom_call.1} parent=15 // pred_check
          %p143 = pneg %p58
        $region18: #{tpu_custom_call.1} parent=15 // pred_check_branch
          %145 = sbr.rel (%p143) target = $region20
        $region19: #{tpu_custom_call.1} parent=15 // pred_region
          %s146 = sand.u32 %s48, 1
          %s147 = scalar_lea.sflag [#allocation3], %s146
          %s148 = sand.u32 %s48, 1
          %s149 = smul.addr %s148, 64
          %s150 = scalar_lea.vmem [#allocation2], %s149
          %s151 = smul.u32 4, %s25
          %153 = vsyncadd %s147, 0
          %s154 = smul.addr %s151, 2
          %s155 = smul.addr %s24, 8
          %s156 = sadd.s32 %s154, %s155
          %s157 = smul.addr %s156, 8
          %s158 = scalar_lea.hbm %s0, %s157
          %s159 = sshll.u32 %s158, 4
          %s160 = int_to_ptr.hbm [resolvable:$true] %s159
          %s161 = sshll.u32 %s150, 4
          %s162 = int_to_ptr.vmem [resolvable:$true] %s161
          %167 = dma.hbm_to_vmem [thread:$0]  %s160, 1024, %s162, %s147, 128, 128, 8
        $region20: #{tpu_custom_call.1} parent=15 // pred_fallthru
          _
        // Predicated region
        $region21: #{tpu_custom_call.1} parent=15 // pred_check
          %p168 = pneg %p88
        $region22: #{tpu_custom_call.1} parent=15 // pred_check_branch
          %170 = sbr.rel (%p168) target = $region24
        $region23: #{tpu_custom_call.1} parent=15 // pred_region
          %s171 = sand.u32 %s78, 1
          %s172 = scalar_lea.sflag [#allocation6], %s171
          %s173 = sand.u32 %s78, 1
          %s174 = smul.addr %s173, 576
          %s175 = scalar_lea.vmem [#allocation5], %s174
          %s176 = smul.u32 4, %s25
          %s177 = smul.u32 2, %s26
          %179 = vsyncadd %s172, 0
          %s180 = smul.addr %s176, 18
          %s181 = sadd.s32 %s177, %s180
          %s182 = smul.addr %s24, 72
          %s183 = sadd.s32 %s181, %s182
          %s184 = smul.addr %s183, 8
          %s185 = scalar_lea.hbm %s1, %s184
          %s186 = sshll.u32 %s185, 4
          %s187 = int_to_ptr.hbm [resolvable:$true] %s186
          %s188 = sshll.u32 %s175, 4
          %s189 = int_to_ptr.vmem [resolvable:$true] %s188
          %194 = dma.hbm_to_vmem [thread:$0]  %s187, 9216, %s189, %s172, 128, 128, 8
        $region24: #{tpu_custom_call.1} parent=15 // pred_fallthru
          _
      $region16: #{tpu_custom_call.1} parent=5 // pred_fallthru
        _
      %p195 = scmp.le.s32.totalorder 1, %s17
      %p196 = scmp.lt.s32.totalorder %s17, 3
      %p197 = pnand %p195, %p196
      %p198 = pneg %p197
      // Predicated region
      $region25: #{tpu_custom_call.1} parent=5 // pred_check
        _
      $region26: #{tpu_custom_call.1} parent=5 // pred_check_branch
        %200 = sbr.rel (%p197) target = $region28
      $region27: #{tpu_custom_call.1} parent=5 // pred_region
        %s201 = ssub.s32 %s17, 1
        %s202 = sand.u32 %s51, 1
        %s203 = scalar_lea.sflag [#allocation3], %s202
        %s204 = sand.u32 %s51, 1
        %s205 = smul.addr %s204, 64
        %s206 = scalar_lea.vmem [#allocation2], %s205
        // Predicated region
        $region29: #{tpu_custom_call.1} parent=27 // pred_check
          %p207 = pneg %p64
        $region30: #{tpu_custom_call.1} parent=27 // pred_check_branch
          %209 = sbr.rel (%p207) target = $region32
        $region31: #{tpu_custom_call.1} parent=27 // pred_region
          %211 = dma.done %s203, 1024
        $region32: #{tpu_custom_call.1} parent=27 // pred_fallthru
          _
        %s212 = sand.u32 %s81, 1
        %s213 = scalar_lea.sflag [#allocation6], %s212
        %s214 = sand.u32 %s81, 1
        %s215 = smul.addr %s214, 576
        %s216 = scalar_lea.vmem [#allocation5], %s215
        // Predicated region
        $region33: #{tpu_custom_call.1} parent=27 // pred_check
          %p217 = pneg %p94
        $region34: #{tpu_custom_call.1} parent=27 // pred_check_branch
          %219 = sbr.rel (%p217) target = $region36
        $region35: #{tpu_custom_call.1} parent=27 // pred_region
          %221 = dma.done %s213, 9216
        $region36: #{tpu_custom_call.1} parent=27 // pred_fallthru
          _
        %s222 = sand.u32 %s51, 1
        %s223 = scalar_lea.sflag [#allocation3], %s222
        %s224 = sand.u32 %s51, 1
        %s225 = smul.addr %s224, 64
        %s226 = scalar_lea.vmem [#allocation2], %s225
        %p227 = pneg %p64
        %p228 = pneg %p61
        %s229 = sand.u32 %s81, 1
        %s230 = scalar_lea.sflag [#allocation6], %s229
        %s231 = sand.u32 %s81, 1
        %s232 = smul.addr %s231, 576
        %s233 = scalar_lea.vmem [#allocation5], %s232
        %p234 = pneg %p94
        %p235 = pneg %p91
        %p236 = pneg %p124
        %p237 = pneg %p121
        %s238 = sand.u32 %s111, 1
        %s239 = scalar_lea.sflag [#allocation4], %s238
        %s240 = sand.u32 %s111, 1
        %s241 = smul.addr %s240, 64
        %s242 = scalar_lea.vmem [#allocation7], %s241
        %s243 = smul.u32 4, %s28
        %s244 = smul.u32 4, %s28
        %s245 = smul.u32 2, %s29
        %s246 = smul.u32 4, %s28
        %s247 = smul.u32 2, %s29
        %s248 = smul.u32 %s29, 16
        %s249 = scalar_lea.vmem %s206, %s248 [#allocation2]
        %v250 = vld [vmem:[%s249] sm:$0xff]
        %v251 = vld [vmem:[%s249 + $0x8] sm:$0xff]
        %v252 = vld [vmem:[%s249 + $0x10] sm:$0xff]
        %v253 = vld [vmem:[%s249 + $0x18] sm:$0xff]
        %v254 = vld [vmem:[%s249 + $0x20] sm:$0xff]
        %v255 = vld [vmem:[%s249 + $0x28] sm:$0xff]
        %v256 = vld [vmem:[%s249 + $0x30] sm:$0xff]
        %v257 = vld [vmem:[%s249 + $0x38] sm:$0xff]
        %s258 = ssub.s32 %s248, 1
        %p259 = scmp.gt.s32.totalorder %s258, 0
        %s260 = scalar_select %p259, %s258, 0
        %s261 = scalar_lea.vmem %s206, %s260 [#allocation2]
        %v262 = vld [vmem:[%s261] sm:$0x1]
        %v263 = vld [vmem:[%s261 + $0x10] sm:$0x1]
        %v264 = vld [vmem:[%s261 + $0x20] sm:$0x1]
        %v265 = vld [vmem:[%s261 + $0x30] sm:$0x1]
        %s266 = sadd.s32 %s248, 16
        %p267 = scmp.lt.s32.totalorder %s266, 15
        %s268 = scalar_select %p267, %s266, 15
        %s269 = scalar_lea.vmem %s206, %s268 [#allocation2]
        %v270 = vld [vmem:[%s269] sm:$0x1]
        %v271 = vld [vmem:[%s269 + $0x10] sm:$0x1]
        %v272 = vld [vmem:[%s269 + $0x20] sm:$0x1]
        %v273 = vld [vmem:[%s269 + $0x30] sm:$0x1]
        %p274 = scmp.gt.s32.totalorder %s248, 0
        %s275 = scalar_select %p274, 1, 0
        %v276 = vstv %s275
        %vm277 = vcmp.eq.s32.totalorder %v276, 1
        %v278 = vsel %vm277, %v262, 0.0
        %v279 = vsel %vm277, %v263, 0.0
        %v280 = vsel %vm277, %v264, 0.0
        %v281 = vsel %vm277, %v265, 0.0
        %p282 = scmp.lt.s32.totalorder %s266, 16
        %s283 = scalar_select %p282, 1, 0
        %v284 = vstv %s283
        %vm285 = vcmp.eq.s32.totalorder %v284, 1
        %v286 = vsel %vm285, %v270, 0.0
        %v287 = vsel %vm285, %v271, 0.0
        %v288 = vsel %vm285, %v272, 0.0
        %v289 = vsel %vm285, %v273, 0.0
        %vm298 = vcmask 1040384
        %v299 = vrot.slane %v250, 7
        %v300 = vrot.slane %v251, 7
        %v301 = vsel %vm298, %v299, %v300
        %v302 = vrot.slane %v252, 7
        %v303 = vrot.slane %v253, 7
        %v304 = vsel %vm298, %v302, %v303
        %v305 = vrot.slane %v254, 7
        %v306 = vrot.slane %v255, 7
        %v307 = vsel %vm298, %v305, %v306
        %v308 = vrot.slane %v256, 7
        %v309 = vrot.slane %v257, 7
        %v310 = vsel %vm298, %v308, %v309
        %v323 = vrot.slane %v286, 7
        %v324 = vrot.slane %v287, 7
        %v325 = vrot.slane %v288, 7
        %v326 = vrot.slane %v289, 7
        %v331 = vsel %vm298, %v278, %v299
        %v332 = vsel %vm298, %v279, %v302
        %v333 = vsel %vm298, %v280, %v305
        %v334 = vsel %vm298, %v281, %v308
        %v335 = vsel %vm298, %v300, %v323
        %v336 = vsel %vm298, %v303, %v324
        %v337 = vsel %vm298, %v306, %v325
        %v338 = vsel %vm298, %v309, %v326
        %347 = vrot.lane.b32.xlu0 %v331, 1
        %v348 = vpop.permute.xlu0 %347
        %349 = vrot.lane.b32.xlu0 %v301, 1
        %v350 = vpop.permute.xlu0 %349
        %351 = vrot.lane.b32.xlu0 %v335, 1
        %v352 = vpop.permute.xlu0 %351
        %353 = vrot.lane.b32.xlu0 %v332, 1
        %v354 = vpop.permute.xlu0 %353
        %355 = vrot.lane.b32.xlu0 %v304, 1
        %v356 = vpop.permute.xlu0 %355
        %357 = vrot.lane.b32.xlu0 %v336, 1
        %v358 = vpop.permute.xlu0 %357
        %359 = vrot.lane.b32.xlu0 %v333, 1
        %v360 = vpop.permute.xlu0 %359
        %361 = vrot.lane.b32.xlu0 %v307, 1
        %v362 = vpop.permute.xlu0 %361
        %363 = vrot.lane.b32.xlu0 %v337, 1
        %v364 = vpop.permute.xlu0 %363
        %365 = vrot.lane.b32.xlu0 %v334, 1
        %v366 = vpop.permute.xlu0 %365
        %367 = vrot.lane.b32.xlu0 %v310, 1
        %v368 = vpop.permute.xlu0 %367
        %369 = vrot.lane.b32.xlu0 %v338, 1
        %v370 = vpop.permute.xlu0 %369
        %vm383 = vcmask 7168
        %v384 = vsel %vm383, 0.0, %v348
        %v385 = vsel %vm383, 0.0, %v350
        %v386 = vsel %vm383, 0.0, %v352
        %v387 = vsel %vm383, 0.0, %v354
        %v388 = vsel %vm383, 0.0, %v356
        %v389 = vsel %vm383, 0.0, %v358
        %v390 = vsel %vm383, 0.0, %v360
        %v391 = vsel %vm383, 0.0, %v362
        %v392 = vsel %vm383, 0.0, %v364
        %v393 = vsel %vm383, 0.0, %v366
        %v394 = vsel %vm383, 0.0, %v368
        %v395 = vsel %vm383, 0.0, %v370
        %vm396 = vcmask 138240
        %v397 = vsel %vm396, %v384, 0.0
        %v398 = vsel %vm396, %v385, 0.0
        %v399 = vsel %vm396, %v386, 0.0
        %v400 = vsel %vm396, %v387, 0.0
        %v401 = vsel %vm396, %v388, 0.0
        %v402 = vsel %vm396, %v389, 0.0
        %v403 = vsel %vm396, %v390, 0.0
        %v404 = vsel %vm396, %v391, 0.0
        %v405 = vsel %vm396, %v392, 0.0
        %v406 = vsel %vm396, %v393, 0.0
        %v407 = vsel %vm396, %v394, 0.0
        %v408 = vsel %vm396, %v395, 0.0
        %v409 = vld [vmem:[%s216] sm:$0xff]
        %v410 = vld [vmem:[%s216 + $0x8] sm:$0xff]
        %v411 = vld [vmem:[%s216 + $0x90] sm:$0xff]
        %v412 = vld [vmem:[%s216 + $0x98] sm:$0xff]
        %v413 = vld [vmem:[%s216 + $0x120] sm:$0xff]
        %v414 = vld [vmem:[%s216 + $0x128] sm:$0xff]
        %v415 = vld [vmem:[%s216 + $0x1b0] sm:$0xff]
        %v416 = vld [vmem:[%s216 + $0x1b8] sm:$0xff]
        %v417 = vmul.f32 %v397, %v409
        %v418 = vmul.f32 %v398, %v410
        %v419 = vmul.f32 %v400, %v411
        %v420 = vmul.f32 %v401, %v412
        %v421 = vmul.f32 %v403, %v413
        %v422 = vmul.f32 %v404, %v414
        %v423 = vmul.f32 %v406, %v415
        %v424 = vmul.f32 %v407, %v416
        %v425 = vadd.f32 %v417, 0.0
        %v426 = vadd.f32 %v418, 0.0
        %v427 = vadd.f32 %v419, 0.0
        %v428 = vadd.f32 %v420, 0.0
        %v429 = vadd.f32 %v421, 0.0
        %v430 = vadd.f32 %v422, 0.0
        %v431 = vadd.f32 %v423, 0.0
        %v432 = vadd.f32 %v424, 0.0
        %s433 = scalar_lea.vmem %s216, 16 [#allocation5]
        %v434 = vld [vmem:[%s433] sm:$0xff]
        %v435 = vld [vmem:[%s433 + $0x8] sm:$0xff]
        %v436 = vld [vmem:[%s433 + $0x90] sm:$0xff]
        %v437 = vld [vmem:[%s433 + $0x98] sm:$0xff]
        %v438 = vld [vmem:[%s433 + $0x120] sm:$0xff]
        %v439 = vld [vmem:[%s433 + $0x128] sm:$0xff]
        %v440 = vld [vmem:[%s433 + $0x1b0] sm:$0xff]
        %v441 = vld [vmem:[%s433 + $0x1b8] sm:$0xff]
        %450 = vrot.lane.b32.xlu0 %v434, 1
        %v451 = vpop.permute.xlu0 %450
        %452 = vrot.lane.b32.xlu0 %v435, 1
        %v453 = vpop.permute.xlu0 %452
        %454 = vrot.lane.b32.xlu0 %v436, 1
        %v455 = vpop.permute.xlu0 %454
        %456 = vrot.lane.b32.xlu0 %v437, 1
        %v457 = vpop.permute.xlu0 %456
        %458 = vrot.lane.b32.xlu0 %v438, 1
        %v459 = vpop.permute.xlu0 %458
        %460 = vrot.lane.b32.xlu0 %v439, 1
        %v461 = vpop.permute.xlu0 %460
        %462 = vrot.lane.b32.xlu0 %v440, 1
        %v463 = vpop.permute.xlu0 %462
        %464 = vrot.lane.b32.xlu0 %v441, 1
        %v465 = vpop.permute.xlu0 %464
        %v474 = vmul.f32 %v397, %v451
        %v475 = vmul.f32 %v398, %v453
        %v476 = vmul.f32 %v400, %v455
        %v477 = vmul.f32 %v401, %v457
        %v478 = vmul.f32 %v403, %v459
        %v479 = vmul.f32 %v404, %v461
        %v480 = vmul.f32 %v406, %v463
        %v481 = vmul.f32 %v407, %v465
        %490 = vrot.lane.b32.xlu0 %v474, 127
        %v491 = vpop.permute.xlu0 %490
        %492 = vrot.lane.b32.xlu0 %v475, 127
        %v493 = vpop.permute.xlu0 %492
        %494 = vrot.lane.b32.xlu0 %v476, 127
        %v495 = vpop.permute.xlu0 %494
        %496 = vrot.lane.b32.xlu0 %v477, 127
        %v497 = vpop.permute.xlu0 %496
        %498 = vrot.lane.b32.xlu0 %v478, 127
        %v499 = vpop.permute.xlu0 %498
        %500 = vrot.lane.b32.xlu0 %v479, 127
        %v501 = vpop.permute.xlu0 %500
        %502 = vrot.lane.b32.xlu0 %v480, 127
        %v503 = vpop.permute.xlu0 %502
        %504 = vrot.lane.b32.xlu0 %v481, 127
        %v505 = vpop.permute.xlu0 %504
        %v514 = vadd.f32 %v425, %v491
        %v515 = vadd.f32 %v426, %v493
        %v516 = vadd.f32 %v427, %v495
        %v517 = vadd.f32 %v428, %v497
        %v518 = vadd.f32 %v429, %v499
        %v519 = vadd.f32 %v430, %v501
        %v520 = vadd.f32 %v431, %v503
        %v521 = vadd.f32 %v432, %v505
        %s522 = scalar_lea.vmem %s216, 32 [#allocation5]
        %v523 = vld [vmem:[%s522] sm:$0xff]
        %v524 = vld [vmem:[%s522 + $0x8] sm:$0xff]
        %v525 = vld [vmem:[%s522 + $0x90] sm:$0xff]
        %v526 = vld [vmem:[%s522 + $0x98] sm:$0xff]
        %v527 = vld [vmem:[%s522 + $0x120] sm:$0xff]
        %v528 = vld [vmem:[%s522 + $0x128] sm:$0xff]
        %v529 = vld [vmem:[%s522 + $0x1b0] sm:$0xff]
        %v530 = vld [vmem:[%s522 + $0x1b8] sm:$0xff]
        %539 = vrot.lane.b32.xlu0 %v523, 2
        %v540 = vpop.permute.xlu0 %539
        %541 = vrot.lane.b32.xlu0 %v524, 2
        %v542 = vpop.permute.xlu0 %541
        %543 = vrot.lane.b32.xlu0 %v525, 2
        %v544 = vpop.permute.xlu0 %543
        %545 = vrot.lane.b32.xlu0 %v526, 2
        %v546 = vpop.permute.xlu0 %545
        %547 = vrot.lane.b32.xlu0 %v527, 2
        %v548 = vpop.permute.xlu0 %547
        %549 = vrot.lane.b32.xlu0 %v528, 2
        %v550 = vpop.permute.xlu0 %549
        %551 = vrot.lane.b32.xlu0 %v529, 2
        %v552 = vpop.permute.xlu0 %551
        %553 = vrot.lane.b32.xlu0 %v530, 2
        %v554 = vpop.permute.xlu0 %553
        %v563 = vmul.f32 %v397, %v540
        %v564 = vmul.f32 %v398, %v542
        %v565 = vmul.f32 %v400, %v544
        %v566 = vmul.f32 %v401, %v546
        %v567 = vmul.f32 %v403, %v548
        %v568 = vmul.f32 %v404, %v550
        %v569 = vmul.f32 %v406, %v552
        %v570 = vmul.f32 %v407, %v554
        %579 = vrot.lane.b32.xlu0 %v563, 126
        %v580 = vpop.permute.xlu0 %579
        %581 = vrot.lane.b32.xlu0 %v564, 126
        %v582 = vpop.permute.xlu0 %581
        %583 = vrot.lane.b32.xlu0 %v565, 126
        %v584 = vpop.permute.xlu0 %583
        %585 = vrot.lane.b32.xlu0 %v566, 126
        %v586 = vpop.permute.xlu0 %585
        %587 = vrot.lane.b32.xlu0 %v567, 126
        %v588 = vpop.permute.xlu0 %587
        %589 = vrot.lane.b32.xlu0 %v568, 126
        %v590 = vpop.permute.xlu0 %589
        %591 = vrot.lane.b32.xlu0 %v569, 126
        %v592 = vpop.permute.xlu0 %591
        %593 = vrot.lane.b32.xlu0 %v570, 126
        %v594 = vpop.permute.xlu0 %593
        %v603 = vadd.f32 %v514, %v580
        %v604 = vadd.f32 %v515, %v582
        %v605 = vadd.f32 %v516, %v584
        %v606 = vadd.f32 %v517, %v586
        %v607 = vadd.f32 %v518, %v588
        %v608 = vadd.f32 %v519, %v590
        %v609 = vadd.f32 %v520, %v592
        %v610 = vadd.f32 %v521, %v594
        %s611 = scalar_lea.vmem %s216, 48 [#allocation5]
        %v612 = vld [vmem:[%s611] sm:$0xff]
        %v613 = vld [vmem:[%s611 + $0x8] sm:$0xff]
        %v614 = vld [vmem:[%s611 + $0x90] sm:$0xff]
        %v615 = vld [vmem:[%s611 + $0x98] sm:$0xff]
        %v616 = vld [vmem:[%s611 + $0x120] sm:$0xff]
        %v617 = vld [vmem:[%s611 + $0x128] sm:$0xff]
        %v618 = vld [vmem:[%s611 + $0x1b0] sm:$0xff]
        %v619 = vld [vmem:[%s611 + $0x1b8] sm:$0xff]
        %v628 = vrot.slane %v612, 7
        %v629 = vrot.slane %v613, 7
        %v630 = vsel %vm298, %v628, %v629
        %v631 = vrot.slane %v614, 7
        %v632 = vrot.slane %v615, 7
        %v633 = vsel %vm298, %v631, %v632
        %v634 = vrot.slane %v616, 7
        %v635 = vrot.slane %v617, 7
        %v636 = vsel %vm298, %v634, %v635
        %v637 = vrot.slane %v618, 7
        %v638 = vrot.slane %v619, 7
        %v639 = vsel %vm298, %v637, %v638
        %v652 = vmul.f32 %v397, %v628
        %v653 = vmul.f32 %v398, %v630
        %v654 = vmul.f32 %v399, %v629
        %v655 = vmul.f32 %v400, %v631
        %v656 = vmul.f32 %v401, %v633
        %v657 = vmul.f32 %v402, %v632
        %v658 = vmul.f32 %v403, %v634
        %v659 = vmul.f32 %v404, %v636
        %v660 = vmul.f32 %v405, %v635
        %v661 = vmul.f32 %v406, %v637
        %v662 = vmul.f32 %v407, %v639
        %v663 = vmul.f32 %v408, %v638
        %vm676 = vcmask 1046528
        %v677 = vrot.slane %v652, 1
        %v678 = vrot.slane %v653, 1
        %v679 = vsel %vm676, %v677, %v678
        %v680 = vrot.slane %v654, 1
        %v681 = vsel %vm676, %v678, %v680
        %v682 = vrot.slane %v655, 1
        %v683 = vrot.slane %v656, 1
        %v684 = vsel %vm676, %v682, %v683
        %v685 = vrot.slane %v657, 1
        %v686 = vsel %vm676, %v683, %v685
        %v687 = vrot.slane %v658, 1
        %v688 = vrot.slane %v659, 1
        %v689 = vsel %vm676, %v687, %v688
        %v690 = vrot.slane %v660, 1
        %v691 = vsel %vm676, %v688, %v690
        %v692 = vrot.slane %v661, 1
        %v693 = vrot.slane %v662, 1
        %v694 = vsel %vm676, %v692, %v693
        %v695 = vrot.slane %v663, 1
        %v696 = vsel %vm676, %v693, %v695
        %v705 = vadd.f32 %v603, %v679
        %v706 = vadd.f32 %v604, %v681
        %v707 = vadd.f32 %v605, %v684
        %v708 = vadd.f32 %v606, %v686
        %v709 = vadd.f32 %v607, %v689
        %v710 = vadd.f32 %v608, %v691
        %v711 = vadd.f32 %v609, %v694
        %v712 = vadd.f32 %v610, %v696
        %s713 = scalar_lea.vmem %s216, 64 [#allocation5]
        %v714 = vld [vmem:[%s713] sm:$0xff]
        %v715 = vld [vmem:[%s713 + $0x8] sm:$0xff]
        %v716 = vld [vmem:[%s713 + $0x90] sm:$0xff]
        %v717 = vld [vmem:[%s713 + $0x98] sm:$0xff]
        %v718 = vld [vmem:[%s713 + $0x120] sm:$0xff]
        %v719 = vld [vmem:[%s713 + $0x128] sm:$0xff]
        %v720 = vld [vmem:[%s713 + $0x1b0] sm:$0xff]
        %v721 = vld [vmem:[%s713 + $0x1b8] sm:$0xff]
        %v730 = vrot.slane %v714, 7
        %v731 = vrot.slane %v715, 7
        %v732 = vsel %vm298, %v730, %v731
        %v733 = vrot.slane %v716, 7
        %v734 = vrot.slane %v717, 7
        %v735 = vsel %vm298, %v733, %v734
        %v736 = vrot.slane %v718, 7
        %v737 = vrot.slane %v719, 7
        %v738 = vsel %vm298, %v736, %v737
        %v739 = vrot.slane %v720, 7
        %v740 = vrot.slane %v721, 7
        %v741 = vsel %vm298, %v739, %v740
        %742 = vrot.lane.b32.xlu0 %v730, 1
        %v743 = vpop.permute.xlu0 %742
        %744 = vrot.lane.b32.xlu0 %v732, 1
        %v745 = vpop.permute.xlu0 %744
        %746 = vrot.lane.b32.xlu0 %v731, 1
        %v747 = vpop.permute.xlu0 %746
        %748 = vrot.lane.b32.xlu0 %v733, 1
        %v749 = vpop.permute.xlu0 %748
        %750 = vrot.lane.b32.xlu0 %v735, 1
        %v751 = vpop.permute.xlu0 %750
        %752 = vrot.lane.b32.xlu0 %v734, 1
        %v753 = vpop.permute.xlu0 %752
        %754 = vrot.lane.b32.xlu0 %v736, 1
        %v755 = vpop.permute.xlu0 %754
        %756 = vrot.lane.b32.xlu0 %v738, 1
        %v757 = vpop.permute.xlu0 %756
        %758 = vrot.lane.b32.xlu0 %v737, 1
        %v759 = vpop.permute.xlu0 %758
        %760 = vrot.lane.b32.xlu0 %v739, 1
        %v761 = vpop.permute.xlu0 %760
        %762 = vrot.lane.b32.xlu0 %v741, 1
        %v763 = vpop.permute.xlu0 %762
        %764 = vrot.lane.b32.xlu0 %v740, 1
        %v765 = vpop.permute.xlu0 %764
        %v778 = vmul.f32 %v397, %v743
        %v779 = vmul.f32 %v398, %v745
        %v780 = vmul.f32 %v399, %v747
        %v781 = vmul.f32 %v400, %v749
        %v782 = vmul.f32 %v401, %v751
        %v783 = vmul.f32 %v402, %v753
        %v784 = vmul.f32 %v403, %v755
        %v785 = vmul.f32 %v404, %v757
        %v786 = vmul.f32 %v405, %v759
        %v787 = vmul.f32 %v406, %v761
        %v788 = vmul.f32 %v407, %v763
        %v789 = vmul.f32 %v408, %v765
        %v802 = vrot.slane %v778, 1
        %v803 = vrot.slane %v779, 1
        %v804 = vsel %vm676, %v802, %v803
        %v805 = vrot.slane %v780, 1
        %v806 = vsel %vm676, %v803, %v805
        %v807 = vrot.slane %v781, 1
        %v808 = vrot.slane %v782, 1
        %v809 = vsel %vm676, %v807, %v808
        %v810 = vrot.slane %v783, 1
        %v811 = vsel %vm676, %v808, %v810
        %v812 = vrot.slane %v784, 1
        %v813 = vrot.slane %v785, 1
        %v814 = vsel %vm676, %v812, %v813
        %v815 = vrot.slane %v786, 1
        %v816 = vsel %vm676, %v813, %v815
        %v817 = vrot.slane %v787, 1
        %v818 = vrot.slane %v788, 1
        %v819 = vsel %vm676, %v817, %v818
        %v820 = vrot.slane %v789, 1
        %v821 = vsel %vm676, %v818, %v820
        %822 = vrot.lane.b32.xlu0 %v804, 127
        %v823 = vpop.permute.xlu0 %822
        %824 = vrot.lane.b32.xlu0 %v806, 127
        %v825 = vpop.permute.xlu0 %824
        %826 = vrot.lane.b32.xlu0 %v809, 127
        %v827 = vpop.permute.xlu0 %826
        %828 = vrot.lane.b32.xlu0 %v811, 127
        %v829 = vpop.permute.xlu0 %828
        %830 = vrot.lane.b32.xlu0 %v814, 127
        %v831 = vpop.permute.xlu0 %830
        %832 = vrot.lane.b32.xlu0 %v816, 127
        %v833 = vpop.permute.xlu0 %832
        %834 = vrot.lane.b32.xlu0 %v819, 127
        %v835 = vpop.permute.xlu0 %834
        %836 = vrot.lane.b32.xlu0 %v821, 127
        %v837 = vpop.permute.xlu0 %836
        %v846 = vadd.f32 %v705, %v823
        %v847 = vadd.f32 %v706, %v825
        %v848 = vadd.f32 %v707, %v827
        %v849 = vadd.f32 %v708, %v829
        %v850 = vadd.f32 %v709, %v831
        %v851 = vadd.f32 %v710, %v833
        %v852 = vadd.f32 %v711, %v835
        %v853 = vadd.f32 %v712, %v837
        %s854 = scalar_lea.vmem %s216, 80 [#allocation5]
        %v855 = vld [vmem:[%s854] sm:$0xff]
        %v856 = vld [vmem:[%s854 + $0x8] sm:$0xff]
        %v857 = vld [vmem:[%s854 + $0x90] sm:$0xff]
        %v858 = vld [vmem:[%s854 + $0x98] sm:$0xff]
        %v859 = vld [vmem:[%s854 + $0x120] sm:$0xff]
        %v860 = vld [vmem:[%s854 + $0x128] sm:$0xff]
        %v861 = vld [vmem:[%s854 + $0x1b0] sm:$0xff]
        %v862 = vld [vmem:[%s854 + $0x1b8] sm:$0xff]
        %v871 = vrot.slane %v855, 7
        %v872 = vrot.slane %v856, 7
        %v873 = vsel %vm298, %v871, %v872
        %v874 = vrot.slane %v857, 7
        %v875 = vrot.slane %v858, 7
        %v876 = vsel %vm298, %v874, %v875
        %v877 = vrot.slane %v859, 7
        %v878 = vrot.slane %v860, 7
        %v879 = vsel %vm298, %v877, %v878
        %v880 = vrot.slane %v861, 7
        %v881 = vrot.slane %v862, 7
        %v882 = vsel %vm298, %v880, %v881
        %883 = vrot.lane.b32.xlu0 %v871, 2
        %v884 = vpop.permute.xlu0 %883
        %885 = vrot.lane.b32.xlu0 %v873, 2
        %v886 = vpop.permute.xlu0 %885
        %887 = vrot.lane.b32.xlu0 %v872, 2
        %v888 = vpop.permute.xlu0 %887
        %889 = vrot.lane.b32.xlu0 %v874, 2
        %v890 = vpop.permute.xlu0 %889
        %891 = vrot.lane.b32.xlu0 %v876, 2
        %v892 = vpop.permute.xlu0 %891
        %893 = vrot.lane.b32.xlu0 %v875, 2
        %v894 = vpop.permute.xlu0 %893
        %895 = vrot.lane.b32.xlu0 %v877, 2
        %v896 = vpop.permute.xlu0 %895
        %897 = vrot.lane.b32.xlu0 %v879, 2
        %v898 = vpop.permute.xlu0 %897
        %899 = vrot.lane.b32.xlu0 %v878, 2
        %v900 = vpop.permute.xlu0 %899
        %901 = vrot.lane.b32.xlu0 %v880, 2
        %v902 = vpop.permute.xlu0 %901
        %903 = vrot.lane.b32.xlu0 %v882, 2
        %v904 = vpop.permute.xlu0 %903
        %905 = vrot.lane.b32.xlu0 %v881, 2
        %v906 = vpop.permute.xlu0 %905
        %v919 = vmul.f32 %v397, %v884
        %v920 = vmul.f32 %v398, %v886
        %v921 = vmul.f32 %v399, %v888
        %v922 = vmul.f32 %v400, %v890
        %v923 = vmul.f32 %v401, %v892
        %v924 = vmul.f32 %v402, %v894
        %v925 = vmul.f32 %v403, %v896
        %v926 = vmul.f32 %v404, %v898
        %v927 = vmul.f32 %v405, %v900
        %v928 = vmul.f32 %v406, %v902
        %v929 = vmul.f32 %v407, %v904
        %v930 = vmul.f32 %v408, %v906
        %v943 = vrot.slane %v919, 1
        %v944 = vrot.slane %v920, 1
        %v945 = vsel %vm676, %v943, %v944
        %v946 = vrot.slane %v921, 1
        %v947 = vsel %vm676, %v944, %v946
        %v948 = vrot.slane %v922, 1
        %v949 = vrot.slane %v923, 1
        %v950 = vsel %vm676, %v948, %v949
        %v951 = vrot.slane %v924, 1
        %v952 = vsel %vm676, %v949, %v951
        %v953 = vrot.slane %v925, 1
        %v954 = vrot.slane %v926, 1
        %v955 = vsel %vm676, %v953, %v954
        %v956 = vrot.slane %v927, 1
        %v957 = vsel %vm676, %v954, %v956
        %v958 = vrot.slane %v928, 1
        %v959 = vrot.slane %v929, 1
        %v960 = vsel %vm676, %v958, %v959
        %v961 = vrot.slane %v930, 1
        %v962 = vsel %vm676, %v959, %v961
        %963 = vrot.lane.b32.xlu0 %v945, 126
        %v964 = vpop.permute.xlu0 %963
        %965 = vrot.lane.b32.xlu0 %v947, 126
        %v966 = vpop.permute.xlu0 %965
        %967 = vrot.lane.b32.xlu0 %v950, 126
        %v968 = vpop.permute.xlu0 %967
        %969 = vrot.lane.b32.xlu0 %v952, 126
        %v970 = vpop.permute.xlu0 %969
        %971 = vrot.lane.b32.xlu0 %v955, 126
        %v972 = vpop.permute.xlu0 %971
        %973 = vrot.lane.b32.xlu0 %v957, 126
        %v974 = vpop.permute.xlu0 %973
        %975 = vrot.lane.b32.xlu0 %v960, 126
        %v976 = vpop.permute.xlu0 %975
        %977 = vrot.lane.b32.xlu0 %v962, 126
        %v978 = vpop.permute.xlu0 %977
        %v987 = vadd.f32 %v846, %v964
        %v988 = vadd.f32 %v847, %v966
        %v989 = vadd.f32 %v848, %v968
        %v990 = vadd.f32 %v849, %v970
        %v991 = vadd.f32 %v850, %v972
        %v992 = vadd.f32 %v851, %v974
        %v993 = vadd.f32 %v852, %v976
        %v994 = vadd.f32 %v853, %v978
        %s995 = scalar_lea.vmem %s216, 96 [#allocation5]
        %v996 = vld [vmem:[%s995] sm:$0xff]
        %v997 = vld [vmem:[%s995 + $0x8] sm:$0xff]
        %v998 = vld [vmem:[%s995 + $0x90] sm:$0xff]
        %v999 = vld [vmem:[%s995 + $0x98] sm:$0xff]
        %v1000 = vld [vmem:[%s995 + $0x120] sm:$0xff]
        %v1001 = vld [vmem:[%s995 + $0x128] sm:$0xff]
        %v1002 = vld [vmem:[%s995 + $0x1b0] sm:$0xff]
        %v1003 = vld [vmem:[%s995 + $0x1b8] sm:$0xff]
        %vm1012 = vcmask 1041408
        %v1013 = vrot.slane %v996, 6
        %v1014 = vrot.slane %v997, 6
        %v1015 = vsel %vm1012, %v1013, %v1014
        %v1016 = vrot.slane %v998, 6
        %v1017 = vrot.slane %v999, 6
        %v1018 = vsel %vm1012, %v1016, %v1017
        %v1019 = vrot.slane %v1000, 6
        %v1020 = vrot.slane %v1001, 6
        %v1021 = vsel %vm1012, %v1019, %v1020
        %v1022 = vrot.slane %v1002, 6
        %v1023 = vrot.slane %v1003, 6
        %v1024 = vsel %vm1012, %v1022, %v1023
        %v1037 = vmul.f32 %v397, %v1013
        %v1038 = vmul.f32 %v398, %v1015
        %v1039 = vmul.f32 %v399, %v1014
        %v1040 = vmul.f32 %v400, %v1016
        %v1041 = vmul.f32 %v401, %v1018
        %v1042 = vmul.f32 %v402, %v1017
        %v1043 = vmul.f32 %v403, %v1019
        %v1044 = vmul.f32 %v404, %v1021
        %v1045 = vmul.f32 %v405, %v1020
        %v1046 = vmul.f32 %v406, %v1022
        %v1047 = vmul.f32 %v407, %v1024
        %v1048 = vmul.f32 %v408, %v1023
        %vm1061 = vcmask 1045504
        %v1062 = vrot.slane %v1037, 2
        %v1063 = vrot.slane %v1038, 2
        %v1064 = vsel %vm1061, %v1062, %v1063
        %v1065 = vrot.slane %v1039, 2
        %v1066 = vsel %vm1061, %v1063, %v1065
        %v1067 = vrot.slane %v1040, 2
        %v1068 = vrot.slane %v1041, 2
        %v1069 = vsel %vm1061, %v1067, %v1068
        %v1070 = vrot.slane %v1042, 2
        %v1071 = vsel %vm1061, %v1068, %v1070
        %v1072 = vrot.slane %v1043, 2
        %v1073 = vrot.slane %v1044, 2
        %v1074 = vsel %vm1061, %v1072, %v1073
        %v1075 = vrot.slane %v1045, 2
        %v1076 = vsel %vm1061, %v1073, %v1075
        %v1077 = vrot.slane %v1046, 2
        %v1078 = vrot.slane %v1047, 2
        %v1079 = vsel %vm1061, %v1077, %v1078
        %v1080 = vrot.slane %v1048, 2
        %v1081 = vsel %vm1061, %v1078, %v1080
        %v1090 = vadd.f32 %v987, %v1064
        %v1091 = vadd.f32 %v988, %v1066
        %v1092 = vadd.f32 %v989, %v1069
        %v1093 = vadd.f32 %v990, %v1071
        %v1094 = vadd.f32 %v991, %v1074
        %v1095 = vadd.f32 %v992, %v1076
        %v1096 = vadd.f32 %v993, %v1079
        %v1097 = vadd.f32 %v994, %v1081
        %s1098 = scalar_lea.vmem %s216, 112 [#allocation5]
        %v1099 = vld [vmem:[%s1098] sm:$0xff]
        %v1100 = vld [vmem:[%s1098 + $0x8] sm:$0xff]
        %v1101 = vld [vmem:[%s1098 + $0x90] sm:$0xff]
        %v1102 = vld [vmem:[%s1098 + $0x98] sm:$0xff]
        %v1103 = vld [vmem:[%s1098 + $0x120] sm:$0xff]
        %v1104 = vld [vmem:[%s1098 + $0x128] sm:$0xff]
        %v1105 = vld [vmem:[%s1098 + $0x1b0] sm:$0xff]
        %v1106 = vld [vmem:[%s1098 + $0x1b8] sm:$0xff]
        %v1115 = vrot.slane %v1099, 6
        %v1116 = vrot.slane %v1100, 6
        %v1117 = vsel %vm1012, %v1115, %v1116
        %v1118 = vrot.slane %v1101, 6
        %v1119 = vrot.slane %v1102, 6
        %v1120 = vsel %vm1012, %v1118, %v1119
        %v1121 = vrot.slane %v1103, 6
        %v1122 = vrot.slane %v1104, 6
        %v1123 = vsel %vm1012, %v1121, %v1122
        %v1124 = vrot.slane %v1105, 6
        %v1125 = vrot.slane %v1106, 6
        %v1126 = vsel %vm1012, %v1124, %v1125
        %1127 = vrot.lane.b32.xlu0 %v1115, 1
        %v1128 = vpop.permute.xlu0 %1127
        %1129 = vrot.lane.b32.xlu0 %v1117, 1
        %v1130 = vpop.permute.xlu0 %1129
        %1131 = vrot.lane.b32.xlu0 %v1116, 1
        %v1132 = vpop.permute.xlu0 %1131
        %1133 = vrot.lane.b32.xlu0 %v1118, 1
        %v1134 = vpop.permute.xlu0 %1133
        %1135 = vrot.lane.b32.xlu0 %v1120, 1
        %v1136 = vpop.permute.xlu0 %1135
        %1137 = vrot.lane.b32.xlu0 %v1119, 1
        %v1138 = vpop.permute.xlu0 %1137
        %1139 = vrot.lane.b32.xlu0 %v1121, 1
        %v1140 = vpop.permute.xlu0 %1139
        %1141 = vrot.lane.b32.xlu0 %v1123, 1
        %v1142 = vpop.permute.xlu0 %1141
        %1143 = vrot.lane.b32.xlu0 %v1122, 1
        %v1144 = vpop.permute.xlu0 %1143
        %1145 = vrot.lane.b32.xlu0 %v1124, 1
        %v1146 = vpop.permute.xlu0 %1145
        %1147 = vrot.lane.b32.xlu0 %v1126, 1
        %v1148 = vpop.permute.xlu0 %1147
        %1149 = vrot.lane.b32.xlu0 %v1125, 1
        %v1150 = vpop.permute.xlu0 %1149
        %v1163 = vmul.f32 %v397, %v1128
        %v1164 = vmul.f32 %v398, %v1130
        %v1165 = vmul.f32 %v399, %v1132
        %v1166 = vmul.f32 %v400, %v1134
        %v1167 = vmul.f32 %v401, %v1136
        %v1168 = vmul.f32 %v402, %v1138
        %v1169 = vmul.f32 %v403, %v1140
        %v1170 = vmul.f32 %v404, %v1142
        %v1171 = vmul.f32 %v405, %v1144
        %v1172 = vmul.f32 %v406, %v1146
        %v1173 = vmul.f32 %v407, %v1148
        %v1174 = vmul.f32 %v408, %v1150
        %v1187 = vrot.slane %v1163, 2
        %v1188 = vrot.slane %v1164, 2
        %v1189 = vsel %vm1061, %v1187, %v1188
        %v1190 = vrot.slane %v1165, 2
        %v1191 = vsel %vm1061, %v1188, %v1190
        %v1192 = vrot.slane %v1166, 2
        %v1193 = vrot.slane %v1167, 2
        %v1194 = vsel %vm1061, %v1192, %v1193
        %v1195 = vrot.slane %v1168, 2
        %v1196 = vsel %vm1061, %v1193, %v1195
        %v1197 = vrot.slane %v1169, 2
        %v1198 = vrot.slane %v1170, 2
        %v1199 = vsel %vm1061, %v1197, %v1198
        %v1200 = vrot.slane %v1171, 2
        %v1201 = vsel %vm1061, %v1198, %v1200
        %v1202 = vrot.slane %v1172, 2
        %v1203 = vrot.slane %v1173, 2
        %v1204 = vsel %vm1061, %v1202, %v1203
        %v1205 = vrot.slane %v1174, 2
        %v1206 = vsel %vm1061, %v1203, %v1205
        %1207 = vrot.lane.b32.xlu0 %v1189, 127
        %v1208 = vpop.permute.xlu0 %1207
        %1209 = vrot.lane.b32.xlu0 %v1191, 127
        %v1210 = vpop.permute.xlu0 %1209
        %1211 = vrot.lane.b32.xlu0 %v1194, 127
        %v1212 = vpop.permute.xlu0 %1211
        %1213 = vrot.lane.b32.xlu0 %v1196, 127
        %v1214 = vpop.permute.xlu0 %1213
        %1215 = vrot.lane.b32.xlu0 %v1199, 127
        %v1216 = vpop.permute.xlu0 %1215
        %1217 = vrot.lane.b32.xlu0 %v1201, 127
        %v1218 = vpop.permute.xlu0 %1217
        %1219 = vrot.lane.b32.xlu0 %v1204, 127
        %v1220 = vpop.permute.xlu0 %1219
        %1221 = vrot.lane.b32.xlu0 %v1206, 127
        %v1222 = vpop.permute.xlu0 %1221
        %v1231 = vadd.f32 %v1090, %v1208
        %v1232 = vadd.f32 %v1091, %v1210
        %v1233 = vadd.f32 %v1092, %v1212
        %v1234 = vadd.f32 %v1093, %v1214
        %v1235 = vadd.f32 %v1094, %v1216
        %v1236 = vadd.f32 %v1095, %v1218
        %v1237 = vadd.f32 %v1096, %v1220
        %v1238 = vadd.f32 %v1097, %v1222
        %s1239 = scalar_lea.vmem %s216, 128 [#allocation5]
        %v1240 = vld [vmem:[%s1239] sm:$0xff]
        %v1241 = vld [vmem:[%s1239 + $0x8] sm:$0xff]
        %v1242 = vld [vmem:[%s1239 + $0x90] sm:$0xff]
        %v1243 = vld [vmem:[%s1239 + $0x98] sm:$0xff]
        %v1244 = vld [vmem:[%s1239 + $0x120] sm:$0xff]
        %v1245 = vld [vmem:[%s1239 + $0x128] sm:$0xff]
        %v1246 = vld [vmem:[%s1239 + $0x1b0] sm:$0xff]
        %v1247 = vld [vmem:[%s1239 + $0x1b8] sm:$0xff]
        %v1256 = vrot.slane %v1240, 6
        %v1257 = vrot.slane %v1241, 6
        %v1258 = vsel %vm1012, %v1256, %v1257
        %v1259 = vrot.slane %v1242, 6
        %v1260 = vrot.slane %v1243, 6
        %v1261 = vsel %vm1012, %v1259, %v1260
        %v1262 = vrot.slane %v1244, 6
        %v1263 = vrot.slane %v1245, 6
        %v1264 = vsel %vm1012, %v1262, %v1263
        %v1265 = vrot.slane %v1246, 6
        %v1266 = vrot.slane %v1247, 6
        %v1267 = vsel %vm1012, %v1265, %v1266
        %1268 = vrot.lane.b32.xlu0 %v1256, 2
        %v1269 = vpop.permute.xlu0 %1268
        %1270 = vrot.lane.b32.xlu0 %v1258, 2
        %v1271 = vpop.permute.xlu0 %1270
        %1272 = vrot.lane.b32.xlu0 %v1257, 2
        %v1273 = vpop.permute.xlu0 %1272
        %1274 = vrot.lane.b32.xlu0 %v1259, 2
        %v1275 = vpop.permute.xlu0 %1274
        %1276 = vrot.lane.b32.xlu0 %v1261, 2
        %v1277 = vpop.permute.xlu0 %1276
        %1278 = vrot.lane.b32.xlu0 %v1260, 2
        %v1279 = vpop.permute.xlu0 %1278
        %1280 = vrot.lane.b32.xlu0 %v1262, 2
        %v1281 = vpop.permute.xlu0 %1280
        %1282 = vrot.lane.b32.xlu0 %v1264, 2
        %v1283 = vpop.permute.xlu0 %1282
        %1284 = vrot.lane.b32.xlu0 %v1263, 2
        %v1285 = vpop.permute.xlu0 %1284
        %1286 = vrot.lane.b32.xlu0 %v1265, 2
        %v1287 = vpop.permute.xlu0 %1286
        %1288 = vrot.lane.b32.xlu0 %v1267, 2
        %v1289 = vpop.permute.xlu0 %1288
        %1290 = vrot.lane.b32.xlu0 %v1266, 2
        %v1291 = vpop.permute.xlu0 %1290
        %v1304 = vmul.f32 %v397, %v1269
        %v1305 = vmul.f32 %v398, %v1271
        %v1306 = vmul.f32 %v399, %v1273
        %v1307 = vmul.f32 %v400, %v1275
        %v1308 = vmul.f32 %v401, %v1277
        %v1309 = vmul.f32 %v402, %v1279
        %v1310 = vmul.f32 %v403, %v1281
        %v1311 = vmul.f32 %v404, %v1283
        %v1312 = vmul.f32 %v405, %v1285
        %v1313 = vmul.f32 %v406, %v1287
        %v1314 = vmul.f32 %v407, %v1289
        %v1315 = vmul.f32 %v408, %v1291
        %v1328 = vrot.slane %v1304, 2
        %v1329 = vrot.slane %v1305, 2
        %v1330 = vsel %vm1061, %v1328, %v1329
        %v1331 = vrot.slane %v1306, 2
        %v1332 = vsel %vm1061, %v1329, %v1331
        %v1333 = vrot.slane %v1307, 2
        %v1334 = vrot.slane %v1308, 2
        %v1335 = vsel %vm1061, %v1333, %v1334
        %v1336 = vrot.slane %v1309, 2
        %v1337 = vsel %vm1061, %v1334, %v1336
        %v1338 = vrot.slane %v1310, 2
        %v1339 = vrot.slane %v1311, 2
        %v1340 = vsel %vm1061, %v1338, %v1339
        %v1341 = vrot.slane %v1312, 2
        %v1342 = vsel %vm1061, %v1339, %v1341
        %v1343 = vrot.slane %v1313, 2
        %v1344 = vrot.slane %v1314, 2
        %v1345 = vsel %vm1061, %v1343, %v1344
        %v1346 = vrot.slane %v1315, 2
        %v1347 = vsel %vm1061, %v1344, %v1346
        %1348 = vrot.lane.b32.xlu0 %v1330, 126
        %v1349 = vpop.permute.xlu0 %1348
        %1350 = vrot.lane.b32.xlu0 %v1332, 126
        %v1351 = vpop.permute.xlu0 %1350
        %1352 = vrot.lane.b32.xlu0 %v1335, 126
        %v1353 = vpop.permute.xlu0 %1352
        %1354 = vrot.lane.b32.xlu0 %v1337, 126
        %v1355 = vpop.permute.xlu0 %1354
        %1356 = vrot.lane.b32.xlu0 %v1340, 126
        %v1357 = vpop.permute.xlu0 %1356
        %1358 = vrot.lane.b32.xlu0 %v1342, 126
        %v1359 = vpop.permute.xlu0 %1358
        %1360 = vrot.lane.b32.xlu0 %v1345, 126
        %v1361 = vpop.permute.xlu0 %1360
        %1362 = vrot.lane.b32.xlu0 %v1347, 126
        %v1363 = vpop.permute.xlu0 %1362
        %v1372 = vadd.f32 %v1231, %v1349
        %v1373 = vadd.f32 %v1232, %v1351
        %v1374 = vadd.f32 %v1233, %v1353
        %v1375 = vadd.f32 %v1234, %v1355
        %v1376 = vadd.f32 %v1235, %v1357
        %v1377 = vadd.f32 %v1236, %v1359
        %v1378 = vadd.f32 %v1237, %v1361
        %v1379 = vadd.f32 %v1238, %v1363
        %vm1380 = vcmask 130048
        %1381 = vst.msk [vmem:[%s242] sm:$0xff] %vm1380, %v1372
        %1382 = vst.msk [vmem:[%s242 + $0x8] sm:$0xff] %vm1380, %v1373
        %1383 = vst.msk [vmem:[%s242 + $0x10] sm:$0xff] %vm1380, %v1374
        %1384 = vst.msk [vmem:[%s242 + $0x18] sm:$0xff] %vm1380, %v1375
        %1385 = vst.msk [vmem:[%s242 + $0x20] sm:$0xff] %vm1380, %v1376
        %1386 = vst.msk [vmem:[%s242 + $0x28] sm:$0xff] %vm1380, %v1377
        %1387 = vst.msk [vmem:[%s242 + $0x30] sm:$0xff] %vm1380, %v1378
        %1388 = vst.msk [vmem:[%s242 + $0x38] sm:$0xff] %vm1380, %v1379
        %s1389 = sand.u32 %s111, 1
        %s1390 = scalar_lea.sflag [#allocation4], %s1389
        %s1391 = sand.u32 %s111, 1
        %s1392 = smul.addr %s1391, 64
        %s1393 = scalar_lea.vmem [#allocation7], %s1392
        // Predicated region
        $region37: #{tpu_custom_call.1} parent=27 // pred_check
          %p1394 = pneg %p121
        $region38: #{tpu_custom_call.1} parent=27 // pred_check_branch
          %1396 = sbr.rel (%p1394) target = $region40
        $region39: #{tpu_custom_call.1} parent=27 // pred_region
          %s1397 = smul.u32 4, %s28
          %s1398 = smul.u32 2, %s29
          %1400 = vsyncadd %s1390, 0
          %s1401 = smul.addr %s1397, 2
          %s1402 = sadd.s32 %s1398, %s1401
          %s1403 = smul.addr %s27, 8
          %s1404 = sadd.s32 %s1402, %s1403
          %s1405 = smul.addr %s1404, 8
          %s1406 = scalar_lea.hbm %s2, %s1405
          %s1407 = sshll.u32 %s1393, 4
          %s1408 = int_to_ptr.vmem [resolvable:$true] %s1407
          %s1409 = sshll.u32 %s1406, 4
          %s1410 = int_to_ptr.hbm [resolvable:$true] %s1409
          %1415 = dma.vmem_to_hbm [thread:$0]  %s1408, 1024, %s1410, %s1390, 128, 128, 8
        $region40: #{tpu_custom_call.1} parent=27 // pred_fallthru
          _
      $region28: #{tpu_custom_call.1} parent=5 // pred_fallthru
        _
      %p1416 = scmp.le.s32.totalorder 2, %s17
      // Predicated region
      $region41: #{tpu_custom_call.1} parent=5 // pred_check
        %p1417 = pneg %p1416
      $region42: #{tpu_custom_call.1} parent=5 // pred_check_branch
        %1419 = sbr.rel (%p1417) target = $region44
      $region43: #{tpu_custom_call.1} parent=5 // pred_region
        %s1420 = ssub.s32 %s17, 2
        // Predicated region
        $region45: #{tpu_custom_call.1} parent=43 // pred_check
          %p1421 = pneg %p127
        $region46: #{tpu_custom_call.1} parent=43 // pred_check_branch
          %1423 = sbr.rel (%p1421) target = $region48
        $region47: #{tpu_custom_call.1} parent=43 // pred_region
          %s1424 = sand.u32 %s112, 1
          %s1425 = scalar_lea.sflag [#allocation4], %s1424
          %s1426 = sand.u32 %s112, 1
          %s1427 = smul.addr %s1426, 64
          %s1428 = scalar_lea.vmem [#allocation7], %s1427
          %1430 = dma.done %s1425, 1024
        $region48: #{tpu_custom_call.1} parent=43 // pred_fallthru
          _
      $region44: #{tpu_custom_call.1} parent=5 // pred_fallthru
        _
    $region6: #{tpu_custom_call.1} parent=1 // loop_footer
      %s21 = sadd.s32 1, %s17
    $region7: #{tpu_custom_call.1} parent=1 // loop_footer_branch
      %16 = sbr.rel target = $region3
    $region8: #{tpu_custom_call.1} parent=1 // loop_exit
      _
    %1431 = vsyncpa [#allocation3], 1
    %s1432 = scalar_lea.sflag [#allocation3], 1
    %1433 = vsyncpa %s1432, 1
    %1434 = vsyncpa [#allocation6], 1
    %s1435 = scalar_lea.sflag [#allocation6], 1
    %1436 = vsyncpa %s1435, 1
    %1437 = vsyncpa [#allocation4], 1
    %s1438 = scalar_lea.sflag [#allocation4], 1
    %1439 = vsyncpa %s1438, 1

</llo_original>
